<compile_context>
chip_gen: v5e
topology: v5e:2x2
jax: 0.10.0
libtpu: 0.0.40
codegen_flags: <defaults>
</compile_context>

<pallas_src>
import functools

import jax
import jax.numpy as jnp
from jax.experimental import pallas as pl
from jax.experimental.pallas import tpu as pltpu

_LANE = 128      # vreg lane width
_SUBLANE = 8     # vreg sublane count
_MAX_C = 512     # lane-dense tile width: 512 * 512 * 4B = 1 MiB f32 tile
_MAX_TR = 512    # tile rows


def _round_up(x: int, m: int) -> int:
    return ((x + m - 1) // m) * m


def _partial_sum_kernel(x_ref, sum_ref):
    """Accumulate the global sum of all tiles into a (1,1) SMEM f32 scalar."""
    @pl.when(pl.program_id(0) == 0)
    def _():
        sum_ref[0, 0] = jnp.float32(0.0)

    # f32 accumulation without materializing an f32 copy of the whole tile.
    sum_ref[0, 0] += jnp.sum(x_ref[...], dtype=jnp.float32)


def _center_kernel(inv_n, sum_ref, x_ref, o_ref):
    """o = x - sum * (1/N); inv_n is a trace-time Python constant."""
    mean = sum_ref[0, 0] * inv_n                      # f32 scalar
    o_ref[...] = x_ref[...] - mean.astype(o_ref.dtype)


def centered_layer(x: jax.Array) -> jax.Array:
    """X - X.mean() over all elements (torch CenteredLayer semantics)."""
    orig_shape = x.shape
    n = 1
    for d in orig_shape:
        n *= d

    # Lane-dense 2-D layout: last dim is a multiple of 128 lanes (<= 512).
    c = min(_MAX_C, _round_up(n, _LANE))
    rows = pl.cdiv(n, c)
    tr = min(_MAX_TR, _round_up(rows, _SUBLANE))
    rows_pad = _round_up(rows, tr)
    grid_r = rows_pad // tr

    flat = x.reshape(-1)
    pad = rows_pad * c - n
    if pad:
        flat = jnp.pad(flat, (0, pad))                # zeros do not affect the sum
    x2 = flat.reshape(rows_pad, c)

    vmem_budget = 32 * 1024 * 1024                    # safe on v5e/v6e/v7x
    cparams_reduce = pltpu.CompilerParams(
        dimension_semantics=("arbitrary",),           # sequential reduction
        vmem_limit_bytes=vmem_budget,
    )
    cparams_map = pltpu.CompilerParams(
        dimension_semantics=("parallel",),            # shard subtract across cores
        vmem_limit_bytes=vmem_budget,
    )

    # Phase 1: global f32 sum into a (1,1) SMEM scalar.
    total = pl.pallas_call(
        _partial_sum_kernel,
        out_shape=jax.ShapeDtypeStruct((1, 1), jnp.float32),
        grid=(grid_r,),
        in_specs=[pl.BlockSpec((tr, c), lambda i: (i, 0))],
        out_specs=pl.BlockSpec((1, 1), lambda i: (0, 0),
                               memory_space=pltpu.MemorySpace.SMEM),
        compiler_params=cparams_reduce,
    )(x2)

    # Phase 2: lane-dense elementwise subtract, mean passed as SMEM scalar.
    inv_n = 1.0 / float(n)
    out2 = pl.pallas_call(
        functools.partial(_center_kernel, inv_n),
        out_shape=jax.ShapeDtypeStruct((rows_pad, c), x.dtype),
        grid=(grid_r,),
        in_specs=[
            pl.BlockSpec((1, 1), lambda i: (0, 0),
                         memory_space=pltpu.MemorySpace.SMEM),
            pl.BlockSpec((tr, c), lambda i: (i, 0)),
        ],
        out_specs=pl.BlockSpec((tr, c), lambda i: (i, 0)),
        compiler_params=cparams_map,
    )(total, x2)

    return out2.reshape(-1)[:n].reshape(orig_shape)


if __name__ == "__main__":
    key = jax.random.PRNGKey(0)

    # Primary small test shape consistent with the (shape-agnostic) module.
    x = jax.random.normal(key, (2, 4, 16, 16), dtype=jnp.float32)
    y = centered_layer(x)
    jax.block_until_ready(y)

    ref = x - jnp.mean(x)
    assert y.shape == x.shape and y.dtype == x.dtype
    assert jnp.allclose(y, ref, atol=1e-5, rtol=1e-5), "mismatch vs reference"
    assert abs(float(jnp.mean(y))) < 1e-5

    # Ragged-size test: exercises the zero-padded tail handling.
    k1, k2 = jax.random.split(key)
    x_odd = jax.random.normal(k1, (3, 5, 37, 41), dtype=jnp.float32)
    y_odd = centered_layer(x_odd)
    jax.block_until_ready(y_odd)
    assert jnp.allclose(y_odd, x_odd - jnp.mean(x_odd), atol=1e-5, rtol=1e-5)

    # Multi-tile test: grid > 1, exercises the SMEM accumulator across steps.
    x_big = jax.random.normal(k2, (256, 4096), dtype=jnp.float32)
    y_big = centered_layer(x_big)
    jax.block_until_ready(y_big)
    assert jnp.allclose(y_big, x_big - jnp.mean(x_big), atol=1e-5, rtol=1e-5)

    print("KERNEL_OK")
</pallas_src>

<mosaic_0001>
module attributes {stable_mosaic.version = 11 : i64} {
  func.func @_partial_sum_kernel(%arg0: i32, %arg1: memref<8x512xf32, #tpu.memory_space<vmem>>, %arg2: memref<1x1xf32, #tpu.memory_space<smem>>) attributes {dimension_semantics = [#tpu.dimension_semantics<arbitrary>], iteration_bounds = array<i64: 1>, scalar_prefetch = 0 : i64, scratch_operands = 0 : i64, tpu.core_type = #tpu.core_type<tc>, window_params = [{transform_indices = @transform_0, window_bounds = array<i64: 8, 512>}, {transform_indices = @transform_1, window_bounds = array<i64: 1, 1>}]} {
    %c0_i32 = arith.constant 0 : i32
    %0 = arith.cmpi eq, %arg0, %c0_i32 : i32
    %1 = arith.extui %0 : i1 to i32
    %c0_i32_0 = arith.constant 0 : i32
    %2 = arith.cmpi ne, %1, %c0_i32_0 : i32
    scf.if %2 {
      %cst_6 = arith.constant 0.000000e+00 : f32
      %c0_7 = arith.constant 0 : index
      %c0_8 = arith.constant 0 : index
      %11 = memref.load %arg2[%c0_7, %c0_8] : memref<1x1xf32, #tpu.memory_space<smem>>
      memref.store %cst_6, %arg2[%c0_7, %c0_8] : memref<1x1xf32, #tpu.memory_space<smem>>
    } else {
    }
    %c0 = arith.constant 0 : index
    %c0_1 = arith.constant 0 : index
    %3 = memref.load %arg2[%c0, %c0_1] : memref<1x1xf32, #tpu.memory_space<smem>>
    %c0_2 = arith.constant 0 : index
    %c0_3 = arith.constant 0 : index
    %4 = vector.load %arg1[%c0_2, %c0_3] : memref<8x512xf32, #tpu.memory_space<vmem>>, vector<8x512xf32>
    %5 = vector.shape_cast %4 : vector<8x512xf32> to vector<1x8x512xf32>
    %cst = arith.constant dense<0.000000e+00> : vector<1xf32>
    %6 = vector.multi_reduction <add>, %5, %cst [1, 2] : vector<1x8x512xf32> to vector<1xf32>
    %7 = vector.shape_cast %6 : vector<1xf32> to vector<1x1x1xf32>
    %8 = vector.extract %7[0, 0, 0] : f32 from vector<1x1x1xf32>
    %9 = arith.addf %3, %8 : f32
    %c0_4 = arith.constant 0 : index
    %c0_5 = arith.constant 0 : index
    %10 = memref.load %arg2[%c0_4, %c0_5] : memref<1x1xf32, #tpu.memory_space<smem>>
    memref.store %9, %arg2[%c0_4, %c0_5] : memref<1x1xf32, #tpu.memory_space<smem>>
    return
  }
  func.func @transform_0(%arg0: i32) -> (i32, i32) {
    %c0_i32 = arith.constant 0 : i32
    %c0_i32_0 = arith.constant 0 : i32
    return %arg0, %c0_i32 : i32, i32
  }
  func.func @transform_1(%arg0: i32) -> (i32, i32) {
    %c0_i32 = arith.constant 0 : i32
    %c0_i32_0 = arith.constant 0 : i32
    %c0_i32_1 = arith.constant 0 : i32
    return %c0_i32, %c0_i32_0 : i32, i32
  }
}

</mosaic_0001>

<llo_original>
// kernel: tpu_custom_call.1
$region0: #{tpu_custom_call.1}
  #allocation0 [shape = 'u32[]', space=smem, size = 0x4, offset = 0x4, fixed_abs, tag = 'smem constant byte address 0x4 - core index']
  #allocation1 [shape = 'u32[72,128]{1,0:T(1,128)}', space=vmem, size = 0x9000, scoped, tag = 'internal scratch']
  %s0 = inlined_call_operand.hbm [shape: f32[8,512], index: 0, kind: input, shape index: {}]
  %s1 = inlined_call_operand.hbm [shape: f32[1,1], index: 1, kind: output, shape index: {}]
  %s2 = sld [smem:[#allocation0]]
  $region22: #{tpu_custom_call.1} parent=0
    _
  %s4 = ssub.s32 1, %s2
  %s5 = scalar_select 0, %s4, %s2
  $region1: #{tpu_custom_call.1} parent=0
    #allocation2 [shape = 'u8[16384]{0}', space=vmem, size = 0x4000, scoped, tag = 'input window, operand 0, single buffered']
    #allocation3 [shape = 's32[1]{0}', space=sflag, size = 0x4, scoped, tag = 'scoped memory for tpu_custom_call.1']
    #allocation4 [shape = 's32[1]{0}', space=sflag, size = 0x4, scoped, tag = 'scoped memory for tpu_custom_call.1']
    #allocation5 [shape = 'u8[512]{0}', space=smem, size = 0x200, scoped, tag = 'output window, operand 0, single buffered']
    %6 = vsyncpa [#allocation3], 0
    %7 = vsyncpa [#allocation4], 0
    // Predicated region
    $region2: #{tpu_custom_call.1} parent=1 // pred_check
      _
    $region3: #{tpu_custom_call.1} parent=1 // pred_check_branch
      %9 = sbr.rel (0) target = $region5
    $region4: #{tpu_custom_call.1} parent=1 // pred_region
      %11 = vsyncadd [#allocation3], 0
      %s13 = sshll.u32 %s0, 4
      %s14 = int_to_ptr.hbm [resolvable:$true] %s13
      %s15 = sshll.u32 [#allocation2], 4
      %s16 = int_to_ptr.vmem [resolvable:$true] %s15
      %18 = dma.hbm_to_vmem [thread:$0]  %s14, 512, %s16, [#allocation3]
    $region5: #{tpu_custom_call.1} parent=1 // pred_fallthru
      _
    // Predicated region
    $region6: #{tpu_custom_call.1} parent=1 // pred_check
      _
    $region7: #{tpu_custom_call.1} parent=1 // pred_check_branch
      %20 = sbr.rel (0) target = $region9
    $region8: #{tpu_custom_call.1} parent=1 // pred_region
      %22 = dma.done [#allocation3], 512
    $region9: #{tpu_custom_call.1} parent=1 // pred_fallthru
      _
    %p23 = scmp.eq.s32.totalorder 0, 0
    // Predicated region
    $region10: #{tpu_custom_call.1} parent=1 // pred_check
      %p24 = pneg %p23
    $region11: #{tpu_custom_call.1} parent=1 // pred_check_branch
      %26 = sbr.rel (%p24) target = $region13
    $region12: #{tpu_custom_call.1} parent=1 // pred_region
      %s27 = scalar_lea.smem [#allocation5], 0
      %28 = sst [smem:[%s27]] 0.0
    $region13: #{tpu_custom_call.1} parent=1 // pred_fallthru
      _
    %s29 = sld [smem:[#allocation5]]
    %v30 = vld [vmem:[#allocation2] sm:$0xff]
    %v31 = vld [vmem:[#allocation2 + $0x8] sm:$0xff]
    %v32 = vld [vmem:[#allocation2 + $0x10] sm:$0xff]
    %v33 = vld [vmem:[#allocation2 + $0x18] sm:$0xff]
    %v34 = vadd.f32 %v30, %v31
    %v35 = vadd.f32 %v34, %v32
    %v36 = vadd.f32 %v35, %v33
    %37 = vadd.xlane.f32.xlu0 %v36
    %v38 = vpop.xlane.xlu0 %37
    %v39 = vrot.slane %v38, 4
    %v40 = vadd.f32 %v38, %v39
    %v41 = vrot.slane %v40, 2
    %v42 = vadd.f32 %v40, %v41
    %v43 = vrot.slane %v42, 1
    %v44 = vadd.f32 %v42, %v43
    %s45 = vtos %v44
    %s46 = sadd.f32 %s29, %s45
    %s47 = scalar_lea.smem [#allocation5], 0
    %48 = sst [smem:[%s47]] %s46
    // Predicated region
    $region14: #{tpu_custom_call.1} parent=1 // pred_check
      _
    $region15: #{tpu_custom_call.1} parent=1 // pred_check_branch
      %50 = sbr.rel (0) target = $region17
    $region16: #{tpu_custom_call.1} parent=1 // pred_region
      %52 = vsyncadd [#allocation4], 0
      %s54 = sshll.u32 %s1, 4
      %s55 = int_to_ptr.hbm [resolvable:$true] %s54
      %57 = dma.smem_to_hbm [#allocation5], 16, %s55, [#allocation4]
    $region17: #{tpu_custom_call.1} parent=1 // pred_fallthru
      _
    // Predicated region
    $region18: #{tpu_custom_call.1} parent=1 // pred_check
      _
    $region19: #{tpu_custom_call.1} parent=1 // pred_check_branch
      %59 = sbr.rel (0) target = $region21
    $region20: #{tpu_custom_call.1} parent=1 // pred_region
      %61 = dma.done [#allocation4], 16
    $region21: #{tpu_custom_call.1} parent=1 // pred_fallthru
      _
    %62 = sfence
    %63 = vsyncpa [#allocation3], 1
    %64 = vsyncpa [#allocation4], 1

</llo_original>
